<compile_context>
chip_gen: v7x
topology: tpu7x:2x2x1
jax: 0.10.0
libtpu: 0.0.40
codegen_flags: <defaults>
</compile_context>

<pallas_src>
import jax
import jax.numpy as jnp
from jax.experimental import pallas as pl
from jax.experimental.pallas import tpu as pltpu

IN_FEATURES = 28 * 28   # 784
HIDDEN = 256


def _discriminator_kernel(x_ref, w1_ref, b1_ref, w2_ref, b2_ref,
                          w3_ref, b3_ref, o_ref):
    # x_ref: (TB, 784) f32 tile streamed from HBM; cast to bf16 in-kernel so
    # no separate full-HBM cast pass is needed in the wrapper.
    x = x_ref[...].astype(jnp.bfloat16)

    # Layer 1: Linear(784 -> 256) + LeakyReLU(0.2)   (bf16 MXU, f32 accumulate)
    h1 = jnp.dot(x, w1_ref[...], preferred_element_type=jnp.float32)
    h1 = h1 + b1_ref[...]                               # (1, 256) broadcasts
    h1 = jnp.maximum(h1, 0.2 * h1)

    # Layer 2: Linear(256 -> 256) + LeakyReLU(0.2)
    h2 = jnp.dot(h1.astype(jnp.bfloat16), w2_ref[...],
                 preferred_element_type=jnp.float32)
    h2 = h2 + b2_ref[...]
    h2 = jnp.maximum(h2, 0.2 * h2)

    # Layer 3: Linear(256 -> 1) + Sigmoid.
    # An N=1 RHS wastes the MXU; do a VPU multiply + cross-lane (XLU) reduce.
    logit = jnp.sum(h2 * w3_ref[...], axis=-1, keepdims=True) + b3_ref[...]
    # TODO(synk): (tb,1) store is masked (1 active lane); a lane-dense (1,tb)
    # output layout would help v5e but needs an in-kernel relayout.
    o_ref[...] = jax.nn.sigmoid(logit)                  # (TB, 1) f32


def discriminator_forward(x, params, *, batch_tile=1024):
    """x: any shape that flattens to (-1, 784), e.g. (B, 1, 28, 28). Returns (B,)."""
    w1, b1, w2, b2, w3, b3 = params
    x2d = x.reshape(-1, IN_FEATURES)
    B = x2d.shape[0]

    # Tile selection:
    #   * >= 2 (even) grid steps whenever there is enough work, so the
    #     "parallel" batch axis splits across v7x's two TensorCores,
    #   * tb ~= ceil(B / num_tiles) rounded up to the 8-row sublane granule,
    #     so padding waste is at most a few rows,
    #   * capped by `batch_tile` to bound the double-buffered f32 x tile.
    num_tiles = pl.cdiv(B, batch_tile)
    if B >= 16:
        num_tiles = max(num_tiles, 2)
        num_tiles += num_tiles % 2          # even count balances the two TCs
    tb = 8 * pl.cdiv(pl.cdiv(B, num_tiles), 8)
    b_pad = tb * num_tiles
    if b_pad != B:
        # Only a few dead rows thanks to the tb choice above; padded rows
        # compute bias-only garbage that is sliced off on return.
        x2d = jnp.pad(x2d, ((0, b_pad - B), (0, 0)))

    w1b = w1.astype(jnp.bfloat16)
    w2b = w2.astype(jnp.bfloat16)
    w3_row = w3.reshape(1, HIDDEN).astype(jnp.float32)   # (256,1) -> (1,256)

    resident = lambda shape: pl.BlockSpec(shape, lambda i: (0, 0))

    out = pl.pallas_call(
        _discriminator_kernel,
        out_shape=jax.ShapeDtypeStruct((b_pad, 1), jnp.float32),
        grid=(num_tiles,),
        in_specs=[
            pl.BlockSpec((tb, IN_FEATURES), lambda i: (i, 0)),   # streamed x (f32)
            resident((IN_FEATURES, HIDDEN)),                     # W1 (bf16)
            resident((1, HIDDEN)),                               # b1
            resident((HIDDEN, HIDDEN)),                          # W2 (bf16)
            resident((1, HIDDEN)),                               # b2
            resident((1, HIDDEN)),                               # W3 as row (f32)
            resident((1, 1)),                                    # b3
        ],
        out_specs=pl.BlockSpec((tb, 1), lambda i: (i, 0)),
        compiler_params=pltpu.CompilerParams(
            dimension_semantics=("parallel",)),
    )(x2d.astype(jnp.float32), w1b, b1.astype(jnp.float32), w2b,
      b2.astype(jnp.float32), w3_row, b3.astype(jnp.float32))

    # matches torch `x.squeeze(dim=1)` -> shape (B,)
    return out[:B, 0]


def init_params(key):
    """Deterministic PyTorch-style uniform(-1/sqrt(fan_in), 1/sqrt(fan_in)) init."""
    k1, k2, k3, k4, k5, k6 = jax.random.split(key, 6)

    def u(k, shape, fan_in):
        bound = 1.0 / jnp.sqrt(fan_in)
        return jax.random.uniform(k, shape, jnp.float32, -bound, bound)

    w1 = u(k1, (IN_FEATURES, HIDDEN), IN_FEATURES)
    b1 = u(k2, (1, HIDDEN), IN_FEATURES)
    w2 = u(k3, (HIDDEN, HIDDEN), HIDDEN)
    b2 = u(k4, (1, HIDDEN), HIDDEN)
    w3 = u(k5, (HIDDEN, 1), HIDDEN)
    b3 = u(k6, (1, 1), HIDDEN)
    return (w1, b1, w2, b2, w3, b3)


def _reference_forward(x, params):
    """Pure-JAX f32 reference for correctness checking."""
    w1, b1, w2, b2, w3, b3 = params
    x2d = x.reshape(-1, IN_FEATURES).astype(jnp.float32)
    h1 = x2d @ w1 + b1
    h1 = jnp.where(h1 > 0, h1, 0.2 * h1)
    h2 = h1 @ w2 + b2
    h2 = jnp.where(h2 > 0, h2, 0.2 * h2)
    logit = h2 @ w3 + b3
    return jax.nn.sigmoid(logit)[:, 0]


if __name__ == "__main__":
    key = jax.random.PRNGKey(0)
    pkey, xkey = jax.random.split(key)

    params = init_params(pkey)
    # MNIST-like input: (B, 1, 28, 28); forward flattens to (B, 784).
    # B=24 exercises the multi-tile (2-step) grid and the padded-rows path.
    x = jax.random.normal(xkey, (24, 1, 28, 28), jnp.float32)

    y = discriminator_forward(x, params)
    jax.block_until_ready(y)

    y_ref = _reference_forward(x, params)
    assert y.shape == (24,), y.shape
    # bf16 inputs/weights with f32 accumulation -> relaxed tolerance.
    assert jnp.allclose(y, y_ref, atol=2e-2, rtol=2e-2), "mismatch vs reference"

    print("KERNEL_OK")
</pallas_src>

<mosaic_0001>
module attributes {stable_mosaic.version = 11 : i64} {
  func.func @_discriminator_kernel(%arg0: i32, %arg1: memref<16x784xf32, #tpu.memory_space<vmem>>, %arg2: memref<784x256xbf16, #tpu.memory_space<vmem>>, %arg3: memref<1x256xf32, #tpu.memory_space<vmem>>, %arg4: memref<256x256xbf16, #tpu.memory_space<vmem>>, %arg5: memref<1x256xf32, #tpu.memory_space<vmem>>, %arg6: memref<1x256xf32, #tpu.memory_space<vmem>>, %arg7: memref<1x1xf32, #tpu.memory_space<vmem>>, %arg8: memref<16x1xf32, #tpu.memory_space<vmem>>) attributes {dimension_semantics = [#tpu.dimension_semantics<parallel>], iteration_bounds = array<i64: 2>, scalar_prefetch = 0 : i64, scratch_operands = 0 : i64, tpu.core_type = #tpu.core_type<tc>, window_params = [{transform_indices = @transform_0, window_bounds = array<i64: 16, 784>}, {pipeline_mode = #tpu.pipeline_mode<synchronous>, transform_indices = @transform_1, window_bounds = array<i64: 784, 256>}, {pipeline_mode = #tpu.pipeline_mode<synchronous>, transform_indices = @transform_2, window_bounds = array<i64: 1, 256>}, {pipeline_mode = #tpu.pipeline_mode<synchronous>, transform_indices = @transform_3, window_bounds = array<i64: 256, 256>}, {pipeline_mode = #tpu.pipeline_mode<synchronous>, transform_indices = @transform_4, window_bounds = array<i64: 1, 256>}, {pipeline_mode = #tpu.pipeline_mode<synchronous>, transform_indices = @transform_5, window_bounds = array<i64: 1, 256>}, {pipeline_mode = #tpu.pipeline_mode<synchronous>, transform_indices = @transform_6, window_bounds = array<i64: 1, 1>}, {transform_indices = @transform_7, window_bounds = array<i64: 16, 1>}]} {
    %c0 = arith.constant 0 : index
    %c0_0 = arith.constant 0 : index
    %0 = vector.load %arg1[%c0, %c0_0] : memref<16x784xf32, #tpu.memory_space<vmem>>, vector<16x784xf32>
    %1 = arith.truncf %0 : vector<16x784xf32> to vector<16x784xbf16>
    %c0_1 = arith.constant 0 : index
    %c0_2 = arith.constant 0 : index
    %2 = vector.load %arg2[%c0_1, %c0_2] : memref<784x256xbf16, #tpu.memory_space<vmem>>, vector<784x256xbf16>
    %cst = arith.constant dense<0.000000e+00> : vector<16x256xf32>
    %3 = tpu.matmul %1, %2, %cst {dimension_numbers = #tpu.dot_dimension_numbers<[1], [0], [0], [1], [0, 0, 1, 1], [], []>} : vector<16x784xbf16>, vector<784x256xbf16>, vector<16x256xf32> -> vector<16x256xf32>
    %c0_3 = arith.constant 0 : index
    %c0_4 = arith.constant 0 : index
    %4 = vector.load %arg3[%c0_3, %c0_4] : memref<1x256xf32, #tpu.memory_space<vmem>>, vector<1x256xf32>
    %5 = vector.broadcast %4 : vector<1x256xf32> to vector<16x256xf32>
    %6 = arith.addf %3, %5 : vector<16x256xf32>
    %cst_5 = arith.constant 2.000000e-01 : f32
    %7 = vector.broadcast %cst_5 : f32 to vector<16x256xf32>
    %8 = arith.mulf %7, %6 : vector<16x256xf32>
    %9 = arith.maximumf %6, %8 : vector<16x256xf32>
    %10 = arith.truncf %9 : vector<16x256xf32> to vector<16x256xbf16>
    %c0_6 = arith.constant 0 : index
    %c0_7 = arith.constant 0 : index
    %11 = vector.load %arg4[%c0_6, %c0_7] : memref<256x256xbf16, #tpu.memory_space<vmem>>, vector<256x256xbf16>
    %cst_8 = arith.constant dense<0.000000e+00> : vector<16x256xf32>
    %12 = tpu.matmul %10, %11, %cst_8 {dimension_numbers = #tpu.dot_dimension_numbers<[1], [0], [0], [1], [0, 0, 1, 1], [], []>} : vector<16x256xbf16>, vector<256x256xbf16>, vector<16x256xf32> -> vector<16x256xf32>
    %c0_9 = arith.constant 0 : index
    %c0_10 = arith.constant 0 : index
    %13 = vector.load %arg5[%c0_9, %c0_10] : memref<1x256xf32, #tpu.memory_space<vmem>>, vector<1x256xf32>
    %14 = vector.broadcast %13 : vector<1x256xf32> to vector<16x256xf32>
    %15 = arith.addf %12, %14 : vector<16x256xf32>
    %cst_11 = arith.constant 2.000000e-01 : f32
    %16 = vector.broadcast %cst_11 : f32 to vector<16x256xf32>
    %17 = arith.mulf %16, %15 : vector<16x256xf32>
    %18 = arith.maximumf %15, %17 : vector<16x256xf32>
    %c0_12 = arith.constant 0 : index
    %c0_13 = arith.constant 0 : index
    %19 = vector.load %arg6[%c0_12, %c0_13] : memref<1x256xf32, #tpu.memory_space<vmem>>, vector<1x256xf32>
    %20 = vector.broadcast %19 : vector<1x256xf32> to vector<16x256xf32>
    %21 = arith.mulf %18, %20 : vector<16x256xf32>
    %cst_14 = arith.constant dense<0.000000e+00> : vector<16xf32>
    %22 = vector.multi_reduction <add>, %21, %cst_14 [1] : vector<16x256xf32> to vector<16xf32>
    %23 = vector.shape_cast %22 : vector<16xf32> to vector<16x1xf32>
    %c0_15 = arith.constant 0 : index
    %c0_16 = arith.constant 0 : index
    %24 = vector.load %arg7[%c0_15, %c0_16] : memref<1x1xf32, #tpu.memory_space<vmem>>, vector<1x1xf32>
    %25 = vector.broadcast %24 : vector<1x1xf32> to vector<16x1xf32>
    %26 = arith.addf %23, %25 : vector<16x1xf32>
    %27 = arith.negf %26 : vector<16x1xf32>
    %28 = math.exp %27 : vector<16x1xf32>
    %cst_17 = arith.constant 1.000000e+00 : f32
    %29 = vector.broadcast %cst_17 : f32 to vector<16x1xf32>
    %30 = arith.addf %29, %28 : vector<16x1xf32>
    %31 = arith.divf %29, %30 : vector<16x1xf32>
    %c0_18 = arith.constant 0 : index
    %c0_19 = arith.constant 0 : index
    %32 = vector.load %arg8[%c0_18, %c0_19] : memref<16x1xf32, #tpu.memory_space<vmem>>, vector<16x1xf32>
    tpu.vector_store %arg8[%c0_18, %c0_19], %31 {strides = array<i32>} : memref<16x1xf32, #tpu.memory_space<vmem>>, vector<16x1xf32>,
    return
  }
  func.func @transform_0(%arg0: i32) -> (i32, i32) {
    %c0_i32 = arith.constant 0 : i32
    %c0_i32_0 = arith.constant 0 : i32
    return %arg0, %c0_i32 : i32, i32
  }
  func.func @transform_1(%arg0: i32) -> (i32, i32) {
    %c0_i32 = arith.constant 0 : i32
    %c0_i32_0 = arith.constant 0 : i32
    %c0_i32_1 = arith.constant 0 : i32
    return %c0_i32, %c0_i32_0 : i32, i32
  }
  func.func @transform_2(%arg0: i32) -> (i32, i32) {
    %c0_i32 = arith.constant 0 : i32
    %c0_i32_0 = arith.constant 0 : i32
    %c0_i32_1 = arith.constant 0 : i32
    return %c0_i32, %c0_i32_0 : i32, i32
  }
  func.func @transform_3(%arg0: i32) -> (i32, i32) {
    %c0_i32 = arith.constant 0 : i32
    %c0_i32_0 = arith.constant 0 : i32
    %c0_i32_1 = arith.constant 0 : i32
    return %c0_i32, %c0_i32_0 : i32, i32
  }
  func.func @transform_4(%arg0: i32) -> (i32, i32) {
    %c0_i32 = arith.constant 0 : i32
    %c0_i32_0 = arith.constant 0 : i32
    %c0_i32_1 = arith.constant 0 : i32
    return %c0_i32, %c0_i32_0 : i32, i32
  }
  func.func @transform_5(%arg0: i32) -> (i32, i32) {
    %c0_i32 = arith.constant 0 : i32
    %c0_i32_0 = arith.constant 0 : i32
    %c0_i32_1 = arith.constant 0 : i32
    return %c0_i32, %c0_i32_0 : i32, i32
  }
  func.func @transform_6(%arg0: i32) -> (i32, i32) {
    %c0_i32 = arith.constant 0 : i32
    %c0_i32_0 = arith.constant 0 : i32
    %c0_i32_1 = arith.constant 0 : i32
    return %c0_i32, %c0_i32_0 : i32, i32
  }
  func.func @transform_7(%arg0: i32) -> (i32, i32) {
    %c0_i32 = arith.constant 0 : i32
    %c0_i32_0 = arith.constant 0 : i32
    return %arg0, %c0_i32 : i32, i32
  }
}

</mosaic_0001>

<llo_original>
// kernel: tpu_custom_call.1
$region0: #{tpu_custom_call.1}
  #allocation0 [shape = 'u32[]', space=smem, size = 0x4, offset = 0x4, fixed_abs, tag = 'smem constant byte address 0x4 - core index']
  #allocation1 [shape = 'u32[144,128]{1,0:T(1,128)}', space=vmem, size = 0x12000, scoped, tag = 'internal scratch']
  #allocation2 [shape = 'f32[1,1]{1,0:T(1,128)S(1)}', space=vmem, size = 0x200, scoped, tag = 'scoped memory for tpu_custom_call.1']
  %s0 = inlined_call_operand.hbm [shape: f32[32,784], index: 0, kind: input, shape index: {}]
  %s1 = inlined_call_operand.hbm [shape: bf16[784,256], index: 1, kind: input, shape index: {}]
  %s2 = inlined_call_operand.vmem [shape: f32[1,256], index: 2, kind: input, shape index: {}]
  %s3 = inlined_call_operand.hbm [shape: bf16[256,256], index: 3, kind: input, shape index: {}]
  %s4 = inlined_call_operand.vmem [shape: f32[1,256], index: 4, kind: input, shape index: {}]
  %s5 = inlined_call_operand.vmem [shape: f32[1,256], index: 5, kind: input, shape index: {}]
  %s6 = inlined_call_operand.<no memory space> [shape: f32[1,1], index: 6, kind: input, shape index: {}]
  %s7 = inlined_call_operand.vmem [shape: f32[32,1], index: 7, kind: output, shape index: {}]
  %s8 = sld [smem:[#allocation0]]
  $region73: #{tpu_custom_call.1} parent=0
    _
  %s10 = ssub.s32 1, %s8
  %s11 = scalar_select 0, %s10, %s8
  %v12 = vstv %s6
  %13 = vst [vmem:[#allocation2] sm:$0x1] %v12
  $region1: #{tpu_custom_call.1} parent=0
    #allocation3 [shape = 'u8[114688]{0}', space=vmem, size = 0x1c000, scoped, tag = 'input window, operand 0']
    #allocation4 [shape = 's32[2]{0}', space=sflag, size = 0x8, scoped, tag = 'scoped memory for tpu_custom_call.1']
    #allocation5 [shape = 'u8[401408]{0}', space=vmem, size = 0x62000, scoped, tag = 'input window, operand 1, single buffered']
    #allocation6 [shape = 's32[1]{0}', space=sflag, size = 0x4, scoped, tag = 'scoped memory for tpu_custom_call.1']
    #allocation7 [shape = 'u8[131072]{0}', space=vmem, size = 0x20000, scoped, tag = 'input window, operand 3, single buffered']
    %14 = vsyncpa [#allocation4], 0
    %s15 = scalar_lea.sflag [#allocation4], 1
    %16 = vsyncpa %s15, 0
    %17 = vsyncpa [#allocation6], 0
    loop: start=0, step=1, limit=4
    $region2: #{tpu_custom_call.1} parent=1 // loop_pre_header
      _
    $region3: #{tpu_custom_call.1} parent=1 // loop_header
      %s19 = sphi 0, %s23
      %p20 = scmp.ge.s32.totalorder %s19, 4
      %s29 = sphi 0, %s31
      %s32 = sphi 0, %s29
      %s33 = sphi 0, %s32
      %s49 = sphi 0, %s33
      %s53 = sphi 0, %s53
      %s55 = sphi 0, %s53
      %s56 = sphi 0, %s55
      %s70 = sphi 0, %s56
      %s74 = sphi 0, %s74
      %s76 = sphi 0, %s74
      %s77 = sphi 0, %s76
      %s91 = sphi 0, %s77
      %s95 = sphi 0, %s95
      %s97 = sphi 0, %s95
      %s98 = sphi 0, %s97
      %s112 = sphi 0, %s98
      %s116 = sphi 0, %s116
      %s118 = sphi 0, %s116
      %s119 = sphi 0, %s118
      %s133 = sphi 0, %s119
      %s137 = sphi 0, %s137
      %s139 = sphi 0, %s137
      %s140 = sphi 0, %s139
      %s154 = sphi 0, %s140
      %s158 = sphi 0, %s158
      %s160 = sphi 0, %s158
      %s161 = sphi 0, %s160
      %s175 = sphi 0, %s161
      %s181 = sphi 0, %s183
      %s184 = sphi 0, %s181
      %s185 = sphi 0, %s184
      %s201 = sphi 0, %s185
    $region4: #{tpu_custom_call.1} parent=1 // loop_header_branch
      %22 = sbr.rel (%p20) target = $region8
    $region5: #{tpu_custom_call.1} parent=1 // loop_body
      %s24 = ssub.s32 %s19, 1
      %s25 = ssub.s32 %s19, 2
      %s26 = sadd.s32 %s19, 1
      %s27 = ssub.s32 %s19, %s26
      %p28 = scmp.eq.s32.totalorder %s27, 0
      %s30 = sadd.s32 %s29, 1
      %s31 = scalar_select %p28, %s29, %s30
      %p34 = pneg %p28
      %p35 = scmp.eq.s32.totalorder %s19, 1
      %p36 = por %p34, %p35
      %p37 = scmp.ne.s32.totalorder %s29, %s32
      %p38 = scmp.eq.s32.totalorder %s19, 0
      %p39 = por %p37, %p38
      %p40 = scmp.ne.s32.totalorder %s29, %s32
      %p41 = scmp.eq.s32.totalorder %s24, 1
      %p42 = por %p40, %p41
      %p43 = scmp.ne.s32.totalorder %s32, %s33
      %p44 = scmp.eq.s32.totalorder %s24, 0
      %p45 = por %p43, %p44
      %p46 = scmp.ne.s32.totalorder %s32, %s33
      %p47 = scmp.eq.s32.totalorder %s25, 1
      %p48 = por %p46, %p47
      %p50 = scmp.ne.s32.totalorder %s33, %s49
      %p51 = scmp.eq.s32.totalorder %s25, 0
      %p52 = por %p50, %p51
      %s54 = sadd.s32 %s53, 1
      %p57 = scmp.eq.s32.totalorder %s19, 1
      %p58 = scmp.ne.s32.totalorder %s53, %s55
      %p59 = scmp.eq.s32.totalorder %s19, 0
      %p60 = por %p58, %p59
      %p61 = scmp.ne.s32.totalorder %s53, %s55
      %p62 = scmp.eq.s32.totalorder %s24, 1
      %p63 = por %p61, %p62
      %p64 = scmp.ne.s32.totalorder %s55, %s56
      %p65 = scmp.eq.s32.totalorder %s24, 0
      %p66 = por %p64, %p65
      %p67 = scmp.ne.s32.totalorder %s55, %s56
      %p68 = scmp.eq.s32.totalorder %s25, 1
      %p69 = por %p67, %p68
      %p71 = scmp.ne.s32.totalorder %s56, %s70
      %p72 = scmp.eq.s32.totalorder %s25, 0
      %p73 = por %p71, %p72
      %s75 = sadd.s32 %s74, 1
      %p78 = scmp.eq.s32.totalorder %s19, 1
      %p79 = scmp.ne.s32.totalorder %s74, %s76
      %p80 = scmp.eq.s32.totalorder %s19, 0
      %p81 = por %p79, %p80
      %p82 = scmp.ne.s32.totalorder %s74, %s76
      %p83 = scmp.eq.s32.totalorder %s24, 1
      %p84 = por %p82, %p83
      %p85 = scmp.ne.s32.totalorder %s76, %s77
      %p86 = scmp.eq.s32.totalorder %s24, 0
      %p87 = por %p85, %p86
      %p88 = scmp.ne.s32.totalorder %s76, %s77
      %p89 = scmp.eq.s32.totalorder %s25, 1
      %p90 = por %p88, %p89
      %p92 = scmp.ne.s32.totalorder %s77, %s91
      %p93 = scmp.eq.s32.totalorder %s25, 0
      %p94 = por %p92, %p93
      %s96 = sadd.s32 %s95, 1
      %p99 = scmp.eq.s32.totalorder %s19, 1
      %p100 = scmp.ne.s32.totalorder %s95, %s97
      %p101 = scmp.eq.s32.totalorder %s19, 0
      %p102 = por %p100, %p101
      %p103 = scmp.ne.s32.totalorder %s95, %s97
      %p104 = scmp.eq.s32.totalorder %s24, 1
      %p105 = por %p103, %p104
      %p106 = scmp.ne.s32.totalorder %s97, %s98
      %p107 = scmp.eq.s32.totalorder %s24, 0
      %p108 = por %p106, %p107
      %p109 = scmp.ne.s32.totalorder %s97, %s98
      %p110 = scmp.eq.s32.totalorder %s25, 1
      %p111 = por %p109, %p110
      %p113 = scmp.ne.s32.totalorder %s98, %s112
      %p114 = scmp.eq.s32.totalorder %s25, 0
      %p115 = por %p113, %p114
      %s117 = sadd.s32 %s116, 1
      %p120 = scmp.eq.s32.totalorder %s19, 1
      %p121 = scmp.ne.s32.totalorder %s116, %s118
      %p122 = scmp.eq.s32.totalorder %s19, 0
      %p123 = por %p121, %p122
      %p124 = scmp.ne.s32.totalorder %s116, %s118
      %p125 = scmp.eq.s32.totalorder %s24, 1
      %p126 = por %p124, %p125
      %p127 = scmp.ne.s32.totalorder %s118, %s119
      %p128 = scmp.eq.s32.totalorder %s24, 0
      %p129 = por %p127, %p128
      %p130 = scmp.ne.s32.totalorder %s118, %s119
      %p131 = scmp.eq.s32.totalorder %s25, 1
      %p132 = por %p130, %p131
      %p134 = scmp.ne.s32.totalorder %s119, %s133
      %p135 = scmp.eq.s32.totalorder %s25, 0
      %p136 = por %p134, %p135
      %s138 = sadd.s32 %s137, 1
      %p141 = scmp.eq.s32.totalorder %s19, 1
      %p142 = scmp.ne.s32.totalorder %s137, %s139
      %p143 = scmp.eq.s32.totalorder %s19, 0
      %p144 = por %p142, %p143
      %p145 = scmp.ne.s32.totalorder %s137, %s139
      %p146 = scmp.eq.s32.totalorder %s24, 1
      %p147 = por %p145, %p146
      %p148 = scmp.ne.s32.totalorder %s139, %s140
      %p149 = scmp.eq.s32.totalorder %s24, 0
      %p150 = por %p148, %p149
      %p151 = scmp.ne.s32.totalorder %s139, %s140
      %p152 = scmp.eq.s32.totalorder %s25, 1
      %p153 = por %p151, %p152
      %p155 = scmp.ne.s32.totalorder %s140, %s154
      %p156 = scmp.eq.s32.totalorder %s25, 0
      %p157 = por %p155, %p156
      %s159 = sadd.s32 %s158, 1
      %p162 = scmp.eq.s32.totalorder %s19, 1
      %p163 = scmp.ne.s32.totalorder %s158, %s160
      %p164 = scmp.eq.s32.totalorder %s19, 0
      %p165 = por %p163, %p164
      %p166 = scmp.ne.s32.totalorder %s158, %s160
      %p167 = scmp.eq.s32.totalorder %s24, 1
      %p168 = por %p166, %p167
      %p169 = scmp.ne.s32.totalorder %s160, %s161
      %p170 = scmp.eq.s32.totalorder %s24, 0
      %p171 = por %p169, %p170
      %p172 = scmp.ne.s32.totalorder %s160, %s161
      %p173 = scmp.eq.s32.totalorder %s25, 1
      %p174 = por %p172, %p173
      %p176 = scmp.ne.s32.totalorder %s161, %s175
      %p177 = scmp.eq.s32.totalorder %s25, 0
      %p178 = por %p176, %p177
      %s179 = ssub.s32 %s19, %s26
      %p180 = scmp.eq.s32.totalorder %s179, 0
      %s182 = sadd.s32 %s181, 1
      %s183 = scalar_select %p180, %s181, %s182
      %p186 = pneg %p180
      %p187 = scmp.eq.s32.totalorder %s19, 1
      %p188 = por %p186, %p187
      %p189 = scmp.ne.s32.totalorder %s181, %s184
      %p190 = scmp.eq.s32.totalorder %s19, 0
      %p191 = por %p189, %p190
      %p192 = scmp.ne.s32.totalorder %s181, %s184
      %p193 = scmp.eq.s32.totalorder %s24, 1
      %p194 = por %p192, %p193
      %p195 = scmp.ne.s32.totalorder %s184, %s185
      %p196 = scmp.eq.s32.totalorder %s24, 0
      %p197 = por %p195, %p196
      %p198 = scmp.ne.s32.totalorder %s184, %s185
      %p199 = scmp.eq.s32.totalorder %s25, 1
      %p200 = por %p198, %p199
      %p202 = scmp.ne.s32.totalorder %s185, %s201
      %p203 = scmp.eq.s32.totalorder %s25, 0
      %p204 = por %p202, %p203
      %p205 = scmp.le.s32.totalorder 1, %s19
      %p206 = scmp.lt.s32.totalorder %s19, 3
      %p207 = pnand %p205, %p206
      %p208 = pneg %p207
      // Predicated region
      $region9: #{tpu_custom_call.1} parent=5 // pred_check
        _
      $region10: #{tpu_custom_call.1} parent=5 // pred_check_branch
        %210 = sbr.rel (%p207) target = $region12
      $region11: #{tpu_custom_call.1} parent=5 // pred_region
        %s211 = ssub.s32 %s19, 1
        // Predicated region
        $region13: #{tpu_custom_call.1} parent=11 // pred_check
          %p212 = pneg %p66
        $region14: #{tpu_custom_call.1} parent=11 // pred_check_branch
          %214 = sbr.rel (%p212) target = $region16
        $region15: #{tpu_custom_call.1} parent=11 // pred_region
          %s216 = ssub.s32 12544, 12544
          %217 = vsyncadd [#allocation6], %s216
          %s218 = sshll.u32 [#allocation5], 4
          %s219 = int_to_ptr.vmem [resolvable:$true] %s218
          %224 = dma.hbm_to_vmem [thread:$0]  %s1, 12544, %s219, [#allocation6], 128, 128, 8
        $region16: #{tpu_custom_call.1} parent=11 // pred_fallthru
          _
        // Predicated region
        $region17: #{tpu_custom_call.1} parent=11 // pred_check
          %p225 = pneg %p87
        $region18: #{tpu_custom_call.1} parent=11 // pred_check_branch
          %227 = sbr.rel (%p225) target = $region20
        $region19: #{tpu_custom_call.1} parent=11 // pred_region
          _
        $region20: #{tpu_custom_call.1} parent=11 // pred_fallthru
          _
        // Predicated region
        $region21: #{tpu_custom_call.1} parent=11 // pred_check
          %p228 = pneg %p108
        $region22: #{tpu_custom_call.1} parent=11 // pred_check_branch
          %230 = sbr.rel (%p228) target = $region24
        $region23: #{tpu_custom_call.1} parent=11 // pred_region
          %s232 = ssub.s32 4096, 4096
          %233 = vsyncadd [#allocation6], %s232
          %s234 = sshll.u32 [#allocation7], 4
          %s235 = int_to_ptr.vmem [resolvable:$true] %s234
          %240 = dma.hbm_to_vmem [thread:$0]  %s3, 4096, %s235, [#allocation6], 128, 128, 8
        $region24: #{tpu_custom_call.1} parent=11 // pred_fallthru
          _
        // Predicated region
        $region25: #{tpu_custom_call.1} parent=11 // pred_check
          %p241 = pneg %p129
        $region26: #{tpu_custom_call.1} parent=11 // pred_check_branch
          %243 = sbr.rel (%p241) target = $region28
        $region27: #{tpu_custom_call.1} parent=11 // pred_region
          _
        $region28: #{tpu_custom_call.1} parent=11 // pred_fallthru
          _
        // Predicated region
        $region29: #{tpu_custom_call.1} parent=11 // pred_check
          %p244 = pneg %p150
        $region30: #{tpu_custom_call.1} parent=11 // pred_check_branch
          %246 = sbr.rel (%p244) target = $region32
        $region31: #{tpu_custom_call.1} parent=11 // pred_region
          _
        $region32: #{tpu_custom_call.1} parent=11 // pred_fallthru
          _
        // Predicated region
        $region33: #{tpu_custom_call.1} parent=11 // pred_check
          %p247 = pneg %p171
        $region34: #{tpu_custom_call.1} parent=11 // pred_check_branch
          %249 = sbr.rel (%p247) target = $region36
        $region35: #{tpu_custom_call.1} parent=11 // pred_region
          _
        $region36: #{tpu_custom_call.1} parent=11 // pred_fallthru
          _
      $region12: #{tpu_custom_call.1} parent=5 // pred_fallthru
        _
      %p250 = scmp.lt.s32.totalorder %s19, 2
      // Predicated region
      $region37: #{tpu_custom_call.1} parent=5 // pred_check
        %p251 = pneg %p250
      $region38: #{tpu_custom_call.1} parent=5 // pred_check_branch
        %253 = sbr.rel (%p251) target = $region40
      $region39: #{tpu_custom_call.1} parent=5 // pred_region
        // Predicated region
        $region41: #{tpu_custom_call.1} parent=39 // pred_check
          %p254 = pneg %p39
        $region42: #{tpu_custom_call.1} parent=39 // pred_check_branch
          %256 = sbr.rel (%p254) target = $region44
        $region43: #{tpu_custom_call.1} parent=39 // pred_region
          %s257 = sand.u32 %s29, 1
          %s258 = scalar_lea.sflag [#allocation4], %s257
          %s259 = sand.u32 %s29, 1
          %s260 = smul.addr %s259, 112
          %s261 = scalar_lea.vmem [#allocation3], %s260
          %s262 = smul.u32 2, %s19
          %s264 = ssub.s32 1792, 1792
          %265 = vsyncadd %s258, %s264
          %s266 = smul.addr %s262, 7
          %s267 = smul.addr %s266, 128
          %s268 = scalar_lea.hbm %s0, %s267
          %s269 = sshll.u32 %s261, 4
          %s270 = int_to_ptr.vmem [resolvable:$true] %s269
          %275 = dma.hbm_to_vmem [thread:$0]  %s268, 1792, %s270, %s258, 896, 896, 56
        $region44: #{tpu_custom_call.1} parent=39 // pred_fallthru
          _
      $region40: #{tpu_custom_call.1} parent=5 // pred_fallthru
        _
      %p276 = scmp.le.s32.totalorder 1, %s19
      %p277 = scmp.lt.s32.totalorder %s19, 3
      %p278 = pnand %p276, %p277
      %p279 = pneg %p278
      // Predicated region
      $region45: #{tpu_custom_call.1} parent=5 // pred_check
        _
      $region46: #{tpu_custom_call.1} parent=5 // pred_check_branch
        %281 = sbr.rel (%p278) target = $region48
      $region47: #{tpu_custom_call.1} parent=5 // pred_region
        %s282 = ssub.s32 %s19, 1
        %s283 = sand.u32 %s32, 1
        %s284 = scalar_lea.sflag [#allocation4], %s283
        %s285 = sand.u32 %s32, 1
        %s286 = smul.addr %s285, 112
        %s287 = scalar_lea.vmem [#allocation3], %s286
        // Predicated region
        $region49: #{tpu_custom_call.1} parent=47 // pred_check
          %p288 = pneg %p45
        $region50: #{tpu_custom_call.1} parent=47 // pred_check_branch
          %290 = sbr.rel (%p288) target = $region52
        $region51: #{tpu_custom_call.1} parent=47 // pred_region
          %291 = dma.done %s284, 1792
        $region52: #{tpu_custom_call.1} parent=47 // pred_fallthru
          _
        // Predicated region
        $region53: #{tpu_custom_call.1} parent=47 // pred_check
          %p292 = pneg %p66
        $region54: #{tpu_custom_call.1} parent=47 // pred_check_branch
          %294 = sbr.rel (%p292) target = $region56
        $region55: #{tpu_custom_call.1} parent=47 // pred_region
          %295 = dma.done [#allocation6], 12544
        $region56: #{tpu_custom_call.1} parent=47 // pred_fallthru
          _
        // Predicated region
        $region57: #{tpu_custom_call.1} parent=47 // pred_check
          %p296 = pneg %p108
        $region58: #{tpu_custom_call.1} parent=47 // pred_check_branch
          %298 = sbr.rel (%p296) target = $region60
        $region59: #{tpu_custom_call.1} parent=47 // pred_region
          %299 = dma.done [#allocation6], 4096
        $region60: #{tpu_custom_call.1} parent=47 // pred_fallthru
          _
        %s300 = sand.u32 %s32, 1
        %s301 = scalar_lea.sflag [#allocation4], %s300
        %s302 = sand.u32 %s32, 1
        %s303 = smul.addr %s302, 112
        %s304 = scalar_lea.vmem [#allocation3], %s303
        %p305 = pneg %p45
        %p306 = pneg %p42
        %p307 = pneg %p66
        %p308 = pneg %p63
        %p309 = pneg %p87
        %p310 = pneg %p84
        %p311 = pneg %p108
        %p312 = pneg %p105
        %p313 = pneg %p129
        %p314 = pneg %p126
        %p315 = pneg %p150
        %p316 = pneg %p147
        %p317 = pneg %p171
        %p318 = pneg %p168
        %p319 = pneg %p197
        %p320 = pneg %p194
        %s321 = smul.u32 2, %s24
        %p322 = scmp.lt.s32.totalorder %s321, 3
        %s323 = scalar_select %p322, %s321, 3
        %s324 = smul.addr %s323, 8
        %s325 = scalar_lea.vmem %s7, %s324
        %s326 = smul.u32 2, %s24
        %s327 = smul.u32 2, %s24
        %p328 = scmp.lt.s32.totalorder %s327, 3
        %s329 = scalar_select %p328, %s327, 3
        %s330 = smul.addr %s329, 8
        %s331 = scalar_lea.vmem %s7, %s330
        %s332 = smul.u32 2, %s24
        %v334 = vld [vmem:[%s287] sm:$0xff]
        %v335 = vld [vmem:[%s287 + $0x8] sm:$0xff]
        %v336 = vld [vmem:[%s287 + $0x10] sm:$0xff]
        %v337 = vld [vmem:[%s287 + $0x18] sm:$0xff]
        %v338 = vld [vmem:[%s287 + $0x20] sm:$0xff]
        %v339 = vld [vmem:[%s287 + $0x28] sm:$0xff]
        %v340 = vld [vmem:[%s287 + $0x30] sm:$0xff]
        %v341 = vld [vmem:[%s287 + $0x38] sm:$0xff]
        %v342 = vld [vmem:[%s287 + $0x40] sm:$0xff]
        %v343 = vld [vmem:[%s287 + $0x48] sm:$0xff]
        %v344 = vld [vmem:[%s287 + $0x50] sm:$0xff]
        %v345 = vld [vmem:[%s287 + $0x58] sm:$0xff]
        %v346 = vld [vmem:[%s287 + $0x60] sm:$0xff]
        %v347 = vld [vmem:[%s287 + $0x68] sm:$0xff]
        %v348 = vpack.c.bf16 %v341, %v334
        %v349 = vpack.c.bf16 %v342, %v335
        %v350 = vpack.c.bf16 %v343, %v336
        %v351 = vpack.c.bf16 %v344, %v337
        %v352 = vpack.c.bf16 %v345, %v338
        %v353 = vpack.c.bf16 %v346, %v339
        %v354 = vpack.c.bf16 %v347, %v340
        %v355 = vld [vmem:[#allocation5] sm:$0xff]
        %v356 = vld [vmem:[#allocation5 + $0x8] sm:$0xff]
        %v357 = vld [vmem:[#allocation5 + $0x10] sm:$0xff]
        %v358 = vld [vmem:[#allocation5 + $0x18] sm:$0xff]
        %v359 = vld [vmem:[#allocation5 + $0x20] sm:$0xff]
        %v360 = vld [vmem:[#allocation5 + $0x28] sm:$0xff]
        %v361 = vld [vmem:[#allocation5 + $0x30] sm:$0xff]
        %v362 = vld [vmem:[#allocation5 + $0x38] sm:$0xff]
        %v363 = vld [vmem:[#allocation5 + $0x40] sm:$0xff]
        %v364 = vld [vmem:[#allocation5 + $0x48] sm:$0xff]
        %v365 = vld [vmem:[#allocation5 + $0x50] sm:$0xff]
        %v366 = vld [vmem:[#allocation5 + $0x58] sm:$0xff]
        %v367 = vld [vmem:[#allocation5 + $0x60] sm:$0xff]
        %v368 = vld [vmem:[#allocation5 + $0x68] sm:$0xff]
        %v369 = vld [vmem:[#allocation5 + $0x70] sm:$0xff]
        %v370 = vld [vmem:[#allocation5 + $0x78] sm:$0xff]
        %v371 = vld [vmem:[#allocation5 + $0x80] sm:$0xff]
        %v372 = vld [vmem:[#allocation5 + $0x88] sm:$0xff]
        %v373 = vld [vmem:[#allocation5 + $0x90] sm:$0xff]
        %v374 = vld [vmem:[#allocation5 + $0x98] sm:$0xff]
        %v375 = vld [vmem:[#allocation5 + $0xa0] sm:$0xff]
        %v376 = vld [vmem:[#allocation5 + $0xa8] sm:$0xff]
        %v377 = vld [vmem:[#allocation5 + $0xb0] sm:$0xff]
        %v378 = vld [vmem:[#allocation5 + $0xb8] sm:$0xff]
        %v379 = vld [vmem:[#allocation5 + $0xc0] sm:$0xff]
        %v380 = vld [vmem:[#allocation5 + $0xc8] sm:$0xff]
        %v381 = vld [vmem:[#allocation5 + $0xd0] sm:$0xff]
        %v382 = vld [vmem:[#allocation5 + $0xd8] sm:$0xff]
        %v383 = vld [vmem:[#allocation5 + $0xe0] sm:$0xff]
        %v384 = vld [vmem:[#allocation5 + $0xe8] sm:$0xff]
        %v385 = vld [vmem:[#allocation5 + $0xf0] sm:$0xff]
        %v386 = vld [vmem:[#allocation5 + $0xf8] sm:$0xff]
        %v387 = vld [vmem:[#allocation5 + $0x100] sm:$0xff]
        %v388 = vld [vmem:[#allocation5 + $0x108] sm:$0xff]
        %v389 = vld [vmem:[#allocation5 + $0x110] sm:$0xff]
        %v390 = vld [vmem:[#allocation5 + $0x118] sm:$0xff]
        %v391 = vld [vmem:[#allocation5 + $0x120] sm:$0xff]
        %v392 = vld [vmem:[#allocation5 + $0x128] sm:$0xff]
        %v393 = vld [vmem:[#allocation5 + $0x130] sm:$0xff]
        %v394 = vld [vmem:[#allocation5 + $0x138] sm:$0xff]
        %v395 = vld [vmem:[#allocation5 + $0x140] sm:$0xff]
        %v396 = vld [vmem:[#allocation5 + $0x148] sm:$0xff]
        %v397 = vld [vmem:[#allocation5 + $0x150] sm:$0xff]
        %v398 = vld [vmem:[#allocation5 + $0x158] sm:$0xff]
        %v399 = vld [vmem:[#allocation5 + $0x160] sm:$0xff]
        %v400 = vld [vmem:[#allocation5 + $0x168] sm:$0xff]
        %v401 = vld [vmem:[#allocation5 + $0x170] sm:$0xff]
        %v402 = vld [vmem:[#allocation5 + $0x178] sm:$0xff]
        %v403 = vld [vmem:[#allocation5 + $0x180] sm:$0xff]
        %v404 = vld [vmem:[#allocation5 + $0x188] sm:$0xff]
        %v405 = vld [vmem:[#allocation5 + $0x190] sm:$0xff]
        %v406 = vld [vmem:[#allocation5 + $0x198] sm:$0xff]
        %v407 = vld [vmem:[#allocation5 + $0x1a0] sm:$0xff]
        %v408 = vld [vmem:[#allocation5 + $0x1a8] sm:$0xff]
        %v409 = vld [vmem:[#allocation5 + $0x1b0] sm:$0xff]
        %v410 = vld [vmem:[#allocation5 + $0x1b8] sm:$0xff]
        %v411 = vld [vmem:[#allocation5 + $0x1c0] sm:$0xff]
        %v412 = vld [vmem:[#allocation5 + $0x1c8] sm:$0xff]
        %v413 = vld [vmem:[#allocation5 + $0x1d0] sm:$0xff]
        %v414 = vld [vmem:[#allocation5 + $0x1d8] sm:$0xff]
        %v415 = vld [vmem:[#allocation5 + $0x1e0] sm:$0xff]
        %v416 = vld [vmem:[#allocation5 + $0x1e8] sm:$0xff]
        %v417 = vld [vmem:[#allocation5 + $0x1f0] sm:$0xff]
        %v418 = vld [vmem:[#allocation5 + $0x1f8] sm:$0xff]
        %v419 = vld [vmem:[#allocation5 + $0x200] sm:$0xff]
        %v420 = vld [vmem:[#allocation5 + $0x208] sm:$0xff]
        %v421 = vld [vmem:[#allocation5 + $0x210] sm:$0xff]
        %v422 = vld [vmem:[#allocation5 + $0x218] sm:$0xff]
        %v423 = vld [vmem:[#allocation5 + $0x220] sm:$0xff]
        %v424 = vld [vmem:[#allocation5 + $0x228] sm:$0xff]
        %v425 = vld [vmem:[#allocation5 + $0x230] sm:$0xff]
        %v426 = vld [vmem:[#allocation5 + $0x238] sm:$0xff]
        %v427 = vld [vmem:[#allocation5 + $0x240] sm:$0xff]
        %v428 = vld [vmem:[#allocation5 + $0x248] sm:$0xff]
        %v429 = vld [vmem:[#allocation5 + $0x250] sm:$0xff]
        %v430 = vld [vmem:[#allocation5 + $0x258] sm:$0xff]
        %v431 = vld [vmem:[#allocation5 + $0x260] sm:$0xff]
        %v432 = vld [vmem:[#allocation5 + $0x268] sm:$0xff]
        %v433 = vld [vmem:[#allocation5 + $0x270] sm:$0xff]
        %v434 = vld [vmem:[#allocation5 + $0x278] sm:$0xff]
        %v435 = vld [vmem:[#allocation5 + $0x280] sm:$0xff]
        %v436 = vld [vmem:[#allocation5 + $0x288] sm:$0xff]
        %v437 = vld [vmem:[#allocation5 + $0x290] sm:$0xff]
        %v438 = vld [vmem:[#allocation5 + $0x298] sm:$0xff]
        %v439 = vld [vmem:[#allocation5 + $0x2a0] sm:$0xff]
        %v440 = vld [vmem:[#allocation5 + $0x2a8] sm:$0xff]
        %v441 = vld [vmem:[#allocation5 + $0x2b0] sm:$0xff]
        %v442 = vld [vmem:[#allocation5 + $0x2b8] sm:$0xff]
        %v443 = vld [vmem:[#allocation5 + $0x2c0] sm:$0xff]
        %v444 = vld [vmem:[#allocation5 + $0x2c8] sm:$0xff]
        %v445 = vld [vmem:[#allocation5 + $0x2d0] sm:$0xff]
        %v446 = vld [vmem:[#allocation5 + $0x2d8] sm:$0xff]
        %v447 = vld [vmem:[#allocation5 + $0x2e0] sm:$0xff]
        %v448 = vld [vmem:[#allocation5 + $0x2e8] sm:$0xff]
        %v449 = vld [vmem:[#allocation5 + $0x2f0] sm:$0xff]
        %v450 = vld [vmem:[#allocation5 + $0x2f8] sm:$0xff]
        %v451 = vld [vmem:[#allocation5 + $0x300] sm:$0xff]
        %v452 = vld [vmem:[#allocation5 + $0x308] sm:$0xff]
        %v453 = vld [vmem:[%s2] sm:$0x3]
        %v455 = vlaneseq
        %v456 = vshrl.u32 %v455, 7
        %v457 = vsub.s32 0, %v456
        %v458 = vrot.slane %v453, %v457
        %v459 = vlaneseq
        %v460 = vshrl.u32 %v459, 7
        %v461 = vsub.s32 1, %v460
        %v462 = vrot.slane %v453, %v461
        %v563 = vunpack.c.l.b16 %v355
        %v564 = vunpack.c.h.b16 %v355
        %v565 = vunpack.c.l.b16 %v356
        %v566 = vunpack.c.h.b16 %v356
        %v567 = vunpack.c.l.b16 %v357
        %v568 = vunpack.c.h.b16 %v357
        %v569 = vunpack.c.l.b16 %v358
        %v570 = vunpack.c.h.b16 %v358
        %v571 = vunpack.c.l.b16 %v359
        %v572 = vunpack.c.h.b16 %v359
        %v573 = vunpack.c.l.b16 %v360
        %v574 = vunpack.c.h.b16 %v360
        %v575 = vunpack.c.l.b16 %v361
        %v576 = vunpack.c.h.b16 %v361
        %v577 = vunpack.c.l.b16 %v362
        %v578 = vunpack.c.h.b16 %v362
        %v579 = vunpack.c.l.b16 %v363
        %v580 = vunpack.c.h.b16 %v363
        %v581 = vunpack.c.l.b16 %v364
        %v582 = vunpack.c.h.b16 %v364
        %v583 = vunpack.c.l.b16 %v365
        %v584 = vunpack.c.h.b16 %v365
        %v585 = vunpack.c.l.b16 %v366
        %v586 = vunpack.c.h.b16 %v366
        %v587 = vunpack.c.l.b16 %v367
        %v588 = vunpack.c.h.b16 %v367
        %v589 = vunpack.c.l.b16 %v368
        %v590 = vunpack.c.h.b16 %v368
        %v591 = vunpack.c.l.b16 %v369
        %v592 = vunpack.c.h.b16 %v369
        %v593 = vunpack.c.l.b16 %v370
        %v594 = vunpack.c.h.b16 %v370
        %v595 = vunpack.c.l.b16 %v371
        %v596 = vunpack.c.h.b16 %v371
        %v597 = vunpack.c.l.b16 %v372
        %v598 = vunpack.c.h.b16 %v372
        %v599 = vunpack.c.l.b16 %v373
        %v600 = vunpack.c.h.b16 %v373
        %v601 = vunpack.c.l.b16 %v374
        %v602 = vunpack.c.h.b16 %v374
        %v603 = vunpack.c.l.b16 %v375
        %v604 = vunpack.c.h.b16 %v375
        %v605 = vunpack.c.l.b16 %v376
        %v606 = vunpack.c.h.b16 %v376
        %v607 = vunpack.c.l.b16 %v377
        %v608 = vunpack.c.h.b16 %v377
        %v609 = vunpack.c.l.b16 %v378
        %v610 = vunpack.c.h.b16 %v378
        %v611 = vunpack.c.l.b16 %v379
        %v612 = vunpack.c.h.b16 %v379
        %v613 = vunpack.c.l.b16 %v380
        %v614 = vunpack.c.h.b16 %v380
        %v615 = vunpack.c.l.b16 %v381
        %v616 = vunpack.c.h.b16 %v381
        %v617 = vunpack.c.l.b16 %v382
        %v618 = vunpack.c.h.b16 %v382
        %v619 = vunpack.c.l.b16 %v383
        %v620 = vunpack.c.h.b16 %v383
        %v621 = vunpack.c.l.b16 %v384
        %v622 = vunpack.c.h.b16 %v384
        %v623 = vunpack.c.l.b16 %v385
        %v624 = vunpack.c.h.b16 %v385
        %v625 = vunpack.c.l.b16 %v386
        %v626 = vunpack.c.h.b16 %v386
        %v627 = vunpack.c.l.b16 %v387
        %v628 = vunpack.c.h.b16 %v387
        %v629 = vunpack.c.l.b16 %v388
        %v630 = vunpack.c.h.b16 %v388
        %v631 = vunpack.c.l.b16 %v389
        %v632 = vunpack.c.h.b16 %v389
        %v633 = vunpack.c.l.b16 %v390
        %v634 = vunpack.c.h.b16 %v390
        %v635 = vunpack.c.l.b16 %v391
        %v636 = vunpack.c.h.b16 %v391
        %v637 = vunpack.c.l.b16 %v392
        %v638 = vunpack.c.h.b16 %v392
        %v639 = vunpack.c.l.b16 %v393
        %v640 = vunpack.c.h.b16 %v393
        %v641 = vunpack.c.l.b16 %v394
        %v642 = vunpack.c.h.b16 %v394
        %v643 = vunpack.c.l.b16 %v395
        %v644 = vunpack.c.h.b16 %v395
        %v645 = vunpack.c.l.b16 %v396
        %v646 = vunpack.c.h.b16 %v396
        %v647 = vunpack.c.l.b16 %v397
        %v648 = vunpack.c.h.b16 %v397
        %v649 = vunpack.c.l.b16 %v398
        %v650 = vunpack.c.h.b16 %v398
        %v651 = vunpack.c.l.b16 %v399
        %v652 = vunpack.c.h.b16 %v399
        %v653 = vunpack.c.l.b16 %v400
        %v654 = vunpack.c.h.b16 %v400
        %v655 = vunpack.c.l.b16 %v401
        %v656 = vunpack.c.h.b16 %v401
        %v657 = vunpack.c.l.b16 %v402
        %v658 = vunpack.c.h.b16 %v402
        %v659 = vunpack.c.l.b16 %v403
        %v660 = vunpack.c.h.b16 %v403
        %v661 = vunpack.c.l.b16 %v404
        %v662 = vunpack.c.h.b16 %v404
        %v663 = vunpack.c.l.b16 %v405
        %v664 = vunpack.c.h.b16 %v405
        %v665 = vunpack.c.l.b16 %v406
        %v666 = vunpack.c.h.b16 %v406
        %v667 = vunpack.c.l.b16 %v407
        %v668 = vunpack.c.h.b16 %v407
        %v669 = vunpack.c.l.b16 %v408
        %v670 = vunpack.c.h.b16 %v408
        %v671 = vunpack.c.l.b16 %v409
        %v672 = vunpack.c.h.b16 %v409
        %v673 = vunpack.c.l.b16 %v410
        %v674 = vunpack.c.h.b16 %v410
        %v675 = vunpack.c.l.b16 %v411
        %v676 = vunpack.c.h.b16 %v411
        %v677 = vunpack.c.l.b16 %v412
        %v678 = vunpack.c.h.b16 %v412
        %v679 = vunpack.c.l.b16 %v413
        %v680 = vunpack.c.h.b16 %v413
        %v681 = vunpack.c.l.b16 %v414
        %v682 = vunpack.c.h.b16 %v414
        %v683 = vunpack.c.l.b16 %v415
        %v684 = vunpack.c.h.b16 %v415
        %v685 = vunpack.c.l.b16 %v416
        %v686 = vunpack.c.h.b16 %v416
        %v687 = vunpack.c.l.b16 %v417
        %v688 = vunpack.c.h.b16 %v417
        %v689 = vunpack.c.l.b16 %v418
        %v690 = vunpack.c.h.b16 %v418
        %v691 = vunpack.c.l.b16 %v419
        %v692 = vunpack.c.h.b16 %v419
        %v693 = vunpack.c.l.b16 %v420
        %v694 = vunpack.c.h.b16 %v420
        %v695 = vunpack.c.l.b16 %v421
        %v696 = vunpack.c.h.b16 %v421
        %v697 = vunpack.c.l.b16 %v422
        %v698 = vunpack.c.h.b16 %v422
        %v699 = vunpack.c.l.b16 %v423
        %v700 = vunpack.c.h.b16 %v423
        %v701 = vunpack.c.l.b16 %v424
        %v702 = vunpack.c.h.b16 %v424
        %v703 = vunpack.c.l.b16 %v425
        %v704 = vunpack.c.h.b16 %v425
        %v705 = vunpack.c.l.b16 %v426
        %v706 = vunpack.c.h.b16 %v426
        %v707 = vunpack.c.l.b16 %v427
        %v708 = vunpack.c.h.b16 %v427
        %v709 = vunpack.c.l.b16 %v428
        %v710 = vunpack.c.h.b16 %v428
        %v711 = vunpack.c.l.b16 %v429
        %v712 = vunpack.c.h.b16 %v429
        %v713 = vunpack.c.l.b16 %v430
        %v714 = vunpack.c.h.b16 %v430
        %v715 = vunpack.c.l.b16 %v431
        %v716 = vunpack.c.h.b16 %v431
        %v717 = vunpack.c.l.b16 %v432
        %v718 = vunpack.c.h.b16 %v432
        %v719 = vunpack.c.l.b16 %v433
        %v720 = vunpack.c.h.b16 %v433
        %v721 = vunpack.c.l.b16 %v434
        %v722 = vunpack.c.h.b16 %v434
        %v723 = vunpack.c.l.b16 %v435
        %v724 = vunpack.c.h.b16 %v435
        %v725 = vunpack.c.l.b16 %v436
        %v726 = vunpack.c.h.b16 %v436
        %v727 = vunpack.c.l.b16 %v437
        %v728 = vunpack.c.h.b16 %v437
        %v729 = vunpack.c.l.b16 %v438
        %v730 = vunpack.c.h.b16 %v438
        %v731 = vunpack.c.l.b16 %v439
        %v732 = vunpack.c.h.b16 %v439
        %v733 = vunpack.c.l.b16 %v440
        %v734 = vunpack.c.h.b16 %v440
        %v735 = vunpack.c.l.b16 %v441
        %v736 = vunpack.c.h.b16 %v441
        %v737 = vunpack.c.l.b16 %v442
        %v738 = vunpack.c.h.b16 %v442
        %v739 = vunpack.c.l.b16 %v443
        %v740 = vunpack.c.h.b16 %v443
        %v741 = vunpack.c.l.b16 %v444
        %v742 = vunpack.c.h.b16 %v444
        %v743 = vunpack.c.l.b16 %v445
        %v744 = vunpack.c.h.b16 %v445
        %v745 = vunpack.c.l.b16 %v446
        %v746 = vunpack.c.h.b16 %v446
        %v747 = vunpack.c.l.b16 %v447
        %v748 = vunpack.c.h.b16 %v447
        %v749 = vunpack.c.l.b16 %v448
        %v750 = vunpack.c.h.b16 %v448
        %v751 = vunpack.c.l.b16 %v449
        %v752 = vunpack.c.h.b16 %v449
        %v753 = vunpack.c.l.b16 %v450
        %v754 = vunpack.c.h.b16 %v450
        %v755 = vunpack.c.l.b16 %v451
        %v756 = vunpack.c.h.b16 %v451
        %v757 = vunpack.c.l.b16 %v452
        %v758 = vunpack.c.h.b16 %v452
        %v759 = vpack.c.b16 %v565, %v563
        %v760 = vpack.c.b16 %v566, %v564
        %v761 = vpack.c.b16 %v569, %v567
        %v762 = vpack.c.b16 %v570, %v568
        %v763 = vpack.c.b16 %v573, %v571
        %v764 = vpack.c.b16 %v574, %v572
        %v765 = vpack.c.b16 %v577, %v575
        %v766 = vpack.c.b16 %v578, %v576
        %v767 = vpack.c.b16 %v581, %v579
        %v768 = vpack.c.b16 %v582, %v580
        %v769 = vpack.c.b16 %v585, %v583
        %v770 = vpack.c.b16 %v586, %v584
        %v771 = vpack.c.b16 %v589, %v587
        %v772 = vpack.c.b16 %v590, %v588
        %v773 = vpack.c.b16 %v593, %v591
        %v774 = vpack.c.b16 %v594, %v592
        %v775 = vpack.c.b16 %v597, %v595
        %v776 = vpack.c.b16 %v598, %v596
        %v777 = vpack.c.b16 %v601, %v599
        %v778 = vpack.c.b16 %v602, %v600
        %v779 = vpack.c.b16 %v605, %v603
        %v780 = vpack.c.b16 %v606, %v604
        %v781 = vpack.c.b16 %v609, %v607
        %v782 = vpack.c.b16 %v610, %v608
        %v783 = vpack.c.b16 %v613, %v611
        %v784 = vpack.c.b16 %v614, %v612
        %v785 = vpack.c.b16 %v617, %v615
        %v786 = vpack.c.b16 %v618, %v616
        %v787 = vpack.c.b16 %v621, %v619
        %v788 = vpack.c.b16 %v622, %v620
        %v789 = vpack.c.b16 %v625, %v623
        %v790 = vpack.c.b16 %v626, %v624
        %v791 = vpack.c.b16 %v629, %v627
        %v792 = vpack.c.b16 %v630, %v628
        %v793 = vpack.c.b16 %v633, %v631
        %v794 = vpack.c.b16 %v634, %v632
        %v795 = vpack.c.b16 %v637, %v635
        %v796 = vpack.c.b16 %v638, %v636
        %v797 = vpack.c.b16 %v641, %v639
        %v798 = vpack.c.b16 %v642, %v640
        %v799 = vpack.c.b16 %v645, %v643
        %v800 = vpack.c.b16 %v646, %v644
        %v801 = vpack.c.b16 %v649, %v647
        %v802 = vpack.c.b16 %v650, %v648
        %v803 = vpack.c.b16 %v653, %v651
        %v804 = vpack.c.b16 %v654, %v652
        %v805 = vpack.c.b16 %v657, %v655
        %v806 = vpack.c.b16 %v658, %v656
        %v807 = vpack.c.b16 %v661, %v659
        %v808 = vpack.c.b16 %v662, %v660
        %v809 = vpack.c.b16 %v665, %v663
        %v810 = vpack.c.b16 %v666, %v664
        %v811 = vpack.c.b16 %v669, %v667
        %v812 = vpack.c.b16 %v670, %v668
        %v813 = vpack.c.b16 %v673, %v671
        %v814 = vpack.c.b16 %v674, %v672
        %v815 = vpack.c.b16 %v677, %v675
        %v816 = vpack.c.b16 %v678, %v676
        %v817 = vpack.c.b16 %v681, %v679
        %v818 = vpack.c.b16 %v682, %v680
        %v819 = vpack.c.b16 %v685, %v683
        %v820 = vpack.c.b16 %v686, %v684
        %v821 = vpack.c.b16 %v689, %v687
        %v822 = vpack.c.b16 %v690, %v688
        %v823 = vpack.c.b16 %v693, %v691
        %v824 = vpack.c.b16 %v694, %v692
        %v825 = vpack.c.b16 %v697, %v695
        %v826 = vpack.c.b16 %v698, %v696
        %v827 = vpack.c.b16 %v701, %v699
        %v828 = vpack.c.b16 %v702, %v700
        %v829 = vpack.c.b16 %v705, %v703
        %v830 = vpack.c.b16 %v706, %v704
        %v831 = vpack.c.b16 %v709, %v707
        %v832 = vpack.c.b16 %v710, %v708
        %v833 = vpack.c.b16 %v713, %v711
        %v834 = vpack.c.b16 %v714, %v712
        %v835 = vpack.c.b16 %v717, %v715
        %v836 = vpack.c.b16 %v718, %v716
        %v837 = vpack.c.b16 %v721, %v719
        %v838 = vpack.c.b16 %v722, %v720
        %v839 = vpack.c.b16 %v725, %v723
        %v840 = vpack.c.b16 %v726, %v724
        %v841 = vpack.c.b16 %v729, %v727
        %v842 = vpack.c.b16 %v730, %v728
        %v843 = vpack.c.b16 %v733, %v731
        %v844 = vpack.c.b16 %v734, %v732
        %v845 = vpack.c.b16 %v737, %v735
        %v846 = vpack.c.b16 %v738, %v736
        %v847 = vpack.c.b16 %v741, %v739
        %v848 = vpack.c.b16 %v742, %v740
        %v849 = vpack.c.b16 %v745, %v743
        %v850 = vpack.c.b16 %v746, %v744
        %v851 = vpack.c.b16 %v749, %v747
        %v852 = vpack.c.b16 %v750, %v748
        %v853 = vpack.c.b16 %v753, %v751
        %v854 = vpack.c.b16 %v754, %v752
        %v855 = vpack.c.b16 %v757, %v755
        %v856 = vpack.c.b16 %v758, %v756
        %vm955 = vcmask 130048
        %v957 = vsel %vm955, %v354, 0
        %959 = vmatprep.subr.bf16.mxu0 %v760
        %960 = vmatpush1.bf16.msra.mxu0 %v759
        %961 = vmatprep.subr.bf16.mxu0 %v762
        %962 = vmatpush1.bf16.msra.mxu0 %v761
        %963 = vmatprep.subr.bf16.mxu0 %v764
        %964 = vmatpush1.bf16.msra.mxu0 %v763
        %965 = vmatprep.subr.bf16.mxu0 %v766
        %966 = vmatpush1.bf16.msra.mxu0 %v765
        %967 = vmatprep.subr.bf16.mxu0 %v768
        %968 = vmatpush1.bf16.msra.mxu0 %v767
        %969 = vmatprep.subr.bf16.mxu0 %v770
        %970 = vmatpush1.bf16.msra.mxu0 %v769
        %971 = vmatprep.subr.bf16.mxu0 %v772
        %972 = vmatpush1.bf16.msra.mxu0 %v771
        %973 = vmatprep.subr.bf16.mxu0 %v774
        %974 = vmatpush1.bf16.msra.mxu0 %v773
        %975 = vmatprep.subr.bf16.mxu0 %v776
        %976 = vmatpush1.bf16.msra.mxu0 %v775
        %977 = vmatprep.subr.bf16.mxu0 %v778
        %978 = vmatpush1.bf16.msra.mxu0 %v777
        %979 = vmatprep.subr.bf16.mxu0 %v780
        %980 = vmatpush1.bf16.msra.mxu0 %v779
        %981 = vmatprep.subr.bf16.mxu0 %v782
        %982 = vmatpush1.bf16.msra.mxu0 %v781
        %983 = vmatprep.subr.bf16.mxu0 %v784
        %984 = vmatpush1.bf16.msra.mxu0 %v783
        %985 = vmatprep.subr.bf16.mxu0 %v786
        %986 = vmatpush1.bf16.msra.mxu0 %v785
        %987 = vmatprep.subr.bf16.mxu0 %v788
        %988 = vmatpush1.bf16.msra.mxu0 %v787
        %989 = vmatprep.subr.bf16.mxu0 %v790
        %990 = vmatpush1.bf16.msra.mxu0 %v789
        %991 = vmatprep.mubr.bf16.mxu0 %v349
        %992 = vmatmul.mubr.bf16.gmra.mrb[0].mxu0 %v348
        %v993 = vpop.f32.mrb[0].mxu0
        %v994 = vadd.f32 %v458, %v993
        %v995 = vpop.f32.mrb[0].mxu0
        %v996 = vadd.f32 %v462, %v995
        %v997 = vpop.f32.mrb[0].mxu0
        %v998 = vadd.f32 %v458, %v997
        %v999 = vpop.f32.mrb[0].mxu0
        %v1000 = vadd.f32 %v462, %v999
        %1001 = vdwg.mxu0
        %1002 = vmatprep.subr.bf16.mxu0 %v792
        %1003 = vmatpush1.bf16.msra.mxu0 %v791
        %1004 = vmatprep.subr.bf16.mxu0 %v794
        %1005 = vmatpush1.bf16.msra.mxu0 %v793
        %1006 = vmatprep.subr.bf16.mxu0 %v796
        %1007 = vmatpush1.bf16.msra.mxu0 %v795
        %1008 = vmatprep.subr.bf16.mxu0 %v798
        %1009 = vmatpush1.bf16.msra.mxu0 %v797
        %1010 = vmatprep.subr.bf16.mxu0 %v800
        %1011 = vmatpush1.bf16.msra.mxu0 %v799
        %1012 = vmatprep.subr.bf16.mxu0 %v802
        %1013 = vmatpush1.bf16.msra.mxu0 %v801
        %1014 = vmatprep.subr.bf16.mxu0 %v804
        %1015 = vmatpush1.bf16.msra.mxu0 %v803
        %1016 = vmatprep.subr.bf16.mxu0 %v806
        %1017 = vmatpush1.bf16.msra.mxu0 %v805
        %1018 = vmatprep.subr.bf16.mxu0 %v808
        %1019 = vmatpush1.bf16.msra.mxu0 %v807
        %1020 = vmatprep.subr.bf16.mxu0 %v810
        %1021 = vmatpush1.bf16.msra.mxu0 %v809
        %1022 = vmatprep.subr.bf16.mxu0 %v812
        %1023 = vmatpush1.bf16.msra.mxu0 %v811
        %1024 = vmatprep.subr.bf16.mxu0 %v814
        %1025 = vmatpush1.bf16.msra.mxu0 %v813
        %1026 = vmatprep.subr.bf16.mxu0 %v816
        %1027 = vmatpush1.bf16.msra.mxu0 %v815
        %1028 = vmatprep.subr.bf16.mxu0 %v818
        %1029 = vmatpush1.bf16.msra.mxu0 %v817
        %1030 = vmatprep.subr.bf16.mxu0 %v820
        %1031 = vmatpush1.bf16.msra.mxu0 %v819
        %1032 = vmatprep.subr.bf16.mxu0 %v822
        %1033 = vmatpush1.bf16.msra.mxu0 %v821
        %1034 = vmatprep.mubr.bf16.mxu0 %v351
        %1035 = vmatmul.mubr.bf16.gmra.mrb[0].mxu0 %v350
        %v1036 = vpop.f32.mrb[0].mxu0
        %v1037 = vadd.f32 %v994, %v1036
        %v1038 = vpop.f32.mrb[0].mxu0
        %v1039 = vadd.f32 %v996, %v1038
        %v1040 = vpop.f32.mrb[0].mxu0
        %v1041 = vadd.f32 %v998, %v1040
        %v1042 = vpop.f32.mrb[0].mxu0
        %v1043 = vadd.f32 %v1000, %v1042
        %1044 = vdwg.mxu0
        %1045 = vmatprep.subr.bf16.mxu0 %v824
        %1046 = vmatpush1.bf16.msra.mxu0 %v823
        %1047 = vmatprep.subr.bf16.mxu0 %v826
        %1048 = vmatpush1.bf16.msra.mxu0 %v825
        %1049 = vmatprep.subr.bf16.mxu0 %v828
        %1050 = vmatpush1.bf16.msra.mxu0 %v827
        %1051 = vmatprep.subr.bf16.mxu0 %v830
        %1052 = vmatpush1.bf16.msra.mxu0 %v829
        %1053 = vmatprep.subr.bf16.mxu0 %v832
        %1054 = vmatpush1.bf16.msra.mxu0 %v831
        %1055 = vmatprep.subr.bf16.mxu0 %v834
        %1056 = vmatpush1.bf16.msra.mxu0 %v833
        %1057 = vmatprep.subr.bf16.mxu0 %v836
        %1058 = vmatpush1.bf16.msra.mxu0 %v835
        %1059 = vmatprep.subr.bf16.mxu0 %v838
        %1060 = vmatpush1.bf16.msra.mxu0 %v837
        %1061 = vmatprep.subr.bf16.mxu0 %v840
        %1062 = vmatpush1.bf16.msra.mxu0 %v839
        %1063 = vmatprep.subr.bf16.mxu0 %v842
        %1064 = vmatpush1.bf16.msra.mxu0 %v841
        %1065 = vmatprep.subr.bf16.mxu0 %v844
        %1066 = vmatpush1.bf16.msra.mxu0 %v843
        %1067 = vmatprep.subr.bf16.mxu0 %v846
        %1068 = vmatpush1.bf16.msra.mxu0 %v845
        %1069 = vmatprep.subr.bf16.mxu0 %v848
        %1070 = vmatpush1.bf16.msra.mxu0 %v847
        %1071 = vmatprep.subr.bf16.mxu0 %v850
        %1072 = vmatpush1.bf16.msra.mxu0 %v849
        %1073 = vmatprep.subr.bf16.mxu0 %v852
        %1074 = vmatpush1.bf16.msra.mxu0 %v851
        %1075 = vmatprep.subr.bf16.mxu0 %v854
        %1076 = vmatpush1.bf16.msra.mxu0 %v853
        %1077 = vmatprep.mubr.bf16.mxu0 %v353
        %1078 = vmatmul.mubr.bf16.gmra.mrb[0].mxu0 %v352
        %v1079 = vpop.f32.mrb[0].mxu0
        %v1080 = vadd.f32 %v1037, %v1079
        %v1081 = vpop.f32.mrb[0].mxu0
        %v1082 = vadd.f32 %v1039, %v1081
        %v1083 = vpop.f32.mrb[0].mxu0
        %v1084 = vadd.f32 %v1041, %v1083
        %v1085 = vpop.f32.mrb[0].mxu0
        %v1086 = vadd.f32 %v1043, %v1085
        %1087 = vdwg.mxu0
        %1088 = vmatprep.subr.bf16.mxu0 %v856
        %1089 = vmatpush1.bf16.msra.mxu0 %v855
        %1090 = vmatprep.subr.bf16.mxu0 0
        %1091 = vmatpush1.bf16.msra.mxu0 0
        %1092 = vmatprep.subr.bf16.mxu0 0
        %1093 = vmatpush1.bf16.msra.mxu0 0
        %1094 = vmatprep.subr.bf16.mxu0 0
        %1095 = vmatpush1.bf16.msra.mxu0 0
        %1096 = vmatprep.subr.bf16.mxu0 0
        %1097 = vmatpush1.bf16.msra.mxu0 0
        %1098 = vmatprep.subr.bf16.mxu0 0
        %1099 = vmatpush1.bf16.msra.mxu0 0
        %1100 = vmatprep.subr.bf16.mxu0 0
        %1101 = vmatpush1.bf16.msra.mxu0 0
        %1102 = vmatprep.subr.bf16.mxu0 0
        %1103 = vmatpush1.bf16.msra.mxu0 0
        %1104 = vmatprep.subr.bf16.mxu0 0
        %1105 = vmatpush1.bf16.msra.mxu0 0
        %1106 = vmatprep.subr.bf16.mxu0 0
        %1107 = vmatpush1.bf16.msra.mxu0 0
        %1108 = vmatprep.subr.bf16.mxu0 0
        %1109 = vmatpush1.bf16.msra.mxu0 0
        %1110 = vmatprep.subr.bf16.mxu0 0
        %1111 = vmatpush1.bf16.msra.mxu0 0
        %1112 = vmatprep.subr.bf16.mxu0 0
        %1113 = vmatpush1.bf16.msra.mxu0 0
        %1114 = vmatprep.subr.bf16.mxu0 0
        %1115 = vmatpush1.bf16.msra.mxu0 0
        %1116 = vmatprep.subr.bf16.mxu0 0
        %1117 = vmatpush1.bf16.msra.mxu0 0
        %1118 = vmatprep.subr.bf16.mxu0 0
        %1119 = vmatpush1.bf16.msra.mxu0 0
        %1120 = vmatprep.mubr.bf16.mxu0 0
        %1121 = vmatmul.mubr.bf16.gmra.mrb[0].mxu0 %v957
        %v1122 = vpop.f32.mrb[0].mxu0
        %v1123 = vadd.f32 %v1080, %v1122
        %v1124 = vpop.f32.mrb[0].mxu0
        %v1125 = vadd.f32 %v1082, %v1124
        %v1126 = vpop.f32.mrb[0].mxu0
        %v1127 = vadd.f32 %v1084, %v1126
        %v1128 = vpop.f32.mrb[0].mxu0
        %v1129 = vadd.f32 %v1086, %v1128
        %1130 = vdwg.mxu0
        %v1131 = vmul.f32 %v1123, 0.2
        %v1132 = vmul.f32 %v1125, 0.2
        %v1133 = vmul.f32 %v1127, 0.2
        %v1134 = vmul.f32 %v1129, 0.2
        %v1135 = vmax.f32 %v1123, %v1131
        %v1136 = vmax.f32 %v1125, %v1132
        %v1137 = vmax.f32 %v1127, %v1133
        %v1138 = vmax.f32 %v1129, %v1134
        %v1139 = vpack.c.bf16 %v1137, %v1135
        %v1140 = vpack.c.bf16 %v1138, %v1136
        %v1141 = vld [vmem:[#allocation7] sm:$0xff]
        %v1142 = vld [vmem:[#allocation7 + $0x8] sm:$0xff]
        %v1143 = vld [vmem:[#allocation7 + $0x10] sm:$0xff]
        %v1144 = vld [vmem:[#allocation7 + $0x18] sm:$0xff]
        %v1145 = vld [vmem:[#allocation7 + $0x20] sm:$0xff]
        %v1146 = vld [vmem:[#allocation7 + $0x28] sm:$0xff]
        %v1147 = vld [vmem:[#allocation7 + $0x30] sm:$0xff]
        %v1148 = vld [vmem:[#allocation7 + $0x38] sm:$0xff]
        %v1149 = vld [vmem:[#allocation7 + $0x40] sm:$0xff]
        %v1150 = vld [vmem:[#allocation7 + $0x48] sm:$0xff]
        %v1151 = vld [vmem:[#allocation7 + $0x50] sm:$0xff]
        %v1152 = vld [vmem:[#allocation7 + $0x58] sm:$0xff]
        %v1153 = vld [vmem:[#allocation7 + $0x60] sm:$0xff]
        %v1154 = vld [vmem:[#allocation7 + $0x68] sm:$0xff]
        %v1155 = vld [vmem:[#allocation7 + $0x70] sm:$0xff]
        %v1156 = vld [vmem:[#allocation7 + $0x78] sm:$0xff]
        %v1157 = vld [vmem:[#allocation7 + $0x80] sm:$0xff]
        %v1158 = vld [vmem:[#allocation7 + $0x88] sm:$0xff]
        %v1159 = vld [vmem:[#allocation7 + $0x90] sm:$0xff]
        %v1160 = vld [vmem:[#allocation7 + $0x98] sm:$0xff]
        %v1161 = vld [vmem:[#allocation7 + $0xa0] sm:$0xff]
        %v1162 = vld [vmem:[#allocation7 + $0xa8] sm:$0xff]
        %v1163 = vld [vmem:[#allocation7 + $0xb0] sm:$0xff]
        %v1164 = vld [vmem:[#allocation7 + $0xb8] sm:$0xff]
        %v1165 = vld [vmem:[#allocation7 + $0xc0] sm:$0xff]
        %v1166 = vld [vmem:[#allocation7 + $0xc8] sm:$0xff]
        %v1167 = vld [vmem:[#allocation7 + $0xd0] sm:$0xff]
        %v1168 = vld [vmem:[#allocation7 + $0xd8] sm:$0xff]
        %v1169 = vld [vmem:[#allocation7 + $0xe0] sm:$0xff]
        %v1170 = vld [vmem:[#allocation7 + $0xe8] sm:$0xff]
        %v1171 = vld [vmem:[#allocation7 + $0xf0] sm:$0xff]
        %v1172 = vld [vmem:[#allocation7 + $0xf8] sm:$0xff]
        %v1173 = vld [vmem:[%s4] sm:$0x3]
        %v1175 = vlaneseq
        %v1176 = vshrl.u32 %v1175, 7
        %v1177 = vsub.s32 0, %v1176
        %v1178 = vrot.slane %v1173, %v1177
        %v1179 = vlaneseq
        %v1180 = vshrl.u32 %v1179, 7
        %v1181 = vsub.s32 1, %v1180
        %v1182 = vrot.slane %v1173, %v1181
        %v1217 = vunpack.c.l.b16 %v1141
        %v1218 = vunpack.c.h.b16 %v1141
        %v1219 = vunpack.c.l.b16 %v1142
        %v1220 = vunpack.c.h.b16 %v1142
        %v1221 = vunpack.c.l.b16 %v1143
        %v1222 = vunpack.c.h.b16 %v1143
        %v1223 = vunpack.c.l.b16 %v1144
        %v1224 = vunpack.c.h.b16 %v1144
        %v1225 = vunpack.c.l.b16 %v1145
        %v1226 = vunpack.c.h.b16 %v1145
        %v1227 = vunpack.c.l.b16 %v1146
        %v1228 = vunpack.c.h.b16 %v1146
        %v1229 = vunpack.c.l.b16 %v1147
        %v1230 = vunpack.c.h.b16 %v1147
        %v1231 = vunpack.c.l.b16 %v1148
        %v1232 = vunpack.c.h.b16 %v1148
        %v1233 = vunpack.c.l.b16 %v1149
        %v1234 = vunpack.c.h.b16 %v1149
        %v1235 = vunpack.c.l.b16 %v1150
        %v1236 = vunpack.c.h.b16 %v1150
        %v1237 = vunpack.c.l.b16 %v1151
        %v1238 = vunpack.c.h.b16 %v1151
        %v1239 = vunpack.c.l.b16 %v1152
        %v1240 = vunpack.c.h.b16 %v1152
        %v1241 = vunpack.c.l.b16 %v1153
        %v1242 = vunpack.c.h.b16 %v1153
        %v1243 = vunpack.c.l.b16 %v1154
        %v1244 = vunpack.c.h.b16 %v1154
        %v1245 = vunpack.c.l.b16 %v1155
        %v1246 = vunpack.c.h.b16 %v1155
        %v1247 = vunpack.c.l.b16 %v1156
        %v1248 = vunpack.c.h.b16 %v1156
        %v1249 = vunpack.c.l.b16 %v1157
        %v1250 = vunpack.c.h.b16 %v1157
        %v1251 = vunpack.c.l.b16 %v1158
        %v1252 = vunpack.c.h.b16 %v1158
        %v1253 = vunpack.c.l.b16 %v1159
        %v1254 = vunpack.c.h.b16 %v1159
        %v1255 = vunpack.c.l.b16 %v1160
        %v1256 = vunpack.c.h.b16 %v1160
        %v1257 = vunpack.c.l.b16 %v1161
        %v1258 = vunpack.c.h.b16 %v1161
        %v1259 = vunpack.c.l.b16 %v1162
        %v1260 = vunpack.c.h.b16 %v1162
        %v1261 = vunpack.c.l.b16 %v1163
        %v1262 = vunpack.c.h.b16 %v1163
        %v1263 = vunpack.c.l.b16 %v1164
        %v1264 = vunpack.c.h.b16 %v1164
        %v1265 = vunpack.c.l.b16 %v1165
        %v1266 = vunpack.c.h.b16 %v1165
        %v1267 = vunpack.c.l.b16 %v1166
        %v1268 = vunpack.c.h.b16 %v1166
        %v1269 = vunpack.c.l.b16 %v1167
        %v1270 = vunpack.c.h.b16 %v1167
        %v1271 = vunpack.c.l.b16 %v1168
        %v1272 = vunpack.c.h.b16 %v1168
        %v1273 = vunpack.c.l.b16 %v1169
        %v1274 = vunpack.c.h.b16 %v1169
        %v1275 = vunpack.c.l.b16 %v1170
        %v1276 = vunpack.c.h.b16 %v1170
        %v1277 = vunpack.c.l.b16 %v1171
        %v1278 = vunpack.c.h.b16 %v1171
        %v1279 = vunpack.c.l.b16 %v1172
        %v1280 = vunpack.c.h.b16 %v1172
        %v1281 = vpack.c.b16 %v1219, %v1217
        %v1282 = vpack.c.b16 %v1220, %v1218
        %v1283 = vpack.c.b16 %v1223, %v1221
        %v1284 = vpack.c.b16 %v1224, %v1222
        %v1285 = vpack.c.b16 %v1227, %v1225
        %v1286 = vpack.c.b16 %v1228, %v1226
        %v1287 = vpack.c.b16 %v1231, %v1229
        %v1288 = vpack.c.b16 %v1232, %v1230
        %v1289 = vpack.c.b16 %v1235, %v1233
        %v1290 = vpack.c.b16 %v1236, %v1234
        %v1291 = vpack.c.b16 %v1239, %v1237
        %v1292 = vpack.c.b16 %v1240, %v1238
        %v1293 = vpack.c.b16 %v1243, %v1241
        %v1294 = vpack.c.b16 %v1244, %v1242
        %v1295 = vpack.c.b16 %v1247, %v1245
        %v1296 = vpack.c.b16 %v1248, %v1246
        %v1297 = vpack.c.b16 %v1251, %v1249
        %v1298 = vpack.c.b16 %v1252, %v1250
        %v1299 = vpack.c.b16 %v1255, %v1253
        %v1300 = vpack.c.b16 %v1256, %v1254
        %v1301 = vpack.c.b16 %v1259, %v1257
        %v1302 = vpack.c.b16 %v1260, %v1258
        %v1303 = vpack.c.b16 %v1263, %v1261
        %v1304 = vpack.c.b16 %v1264, %v1262
        %v1305 = vpack.c.b16 %v1267, %v1265
        %v1306 = vpack.c.b16 %v1268, %v1266
        %v1307 = vpack.c.b16 %v1271, %v1269
        %v1308 = vpack.c.b16 %v1272, %v1270
        %v1309 = vpack.c.b16 %v1275, %v1273
        %v1310 = vpack.c.b16 %v1276, %v1274
        %v1311 = vpack.c.b16 %v1279, %v1277
        %v1312 = vpack.c.b16 %v1280, %v1278
        %1345 = vmatprep.subr.bf16.mxu0 %v1282
        %1346 = vmatpush1.bf16.msra.mxu0 %v1281
        %1347 = vmatprep.subr.bf16.mxu0 %v1284
        %1348 = vmatpush1.bf16.msra.mxu0 %v1283
        %1349 = vmatprep.subr.bf16.mxu0 %v1286
        %1350 = vmatpush1.bf16.msra.mxu0 %v1285
        %1351 = vmatprep.subr.bf16.mxu0 %v1288
        %1352 = vmatpush1.bf16.msra.mxu0 %v1287
        %1353 = vmatprep.subr.bf16.mxu0 %v1290
        %1354 = vmatpush1.bf16.msra.mxu0 %v1289
        %1355 = vmatprep.subr.bf16.mxu0 %v1292
        %1356 = vmatpush1.bf16.msra.mxu0 %v1291
        %1357 = vmatprep.subr.bf16.mxu0 %v1294
        %1358 = vmatpush1.bf16.msra.mxu0 %v1293
        %1359 = vmatprep.subr.bf16.mxu0 %v1296
        %1360 = vmatpush1.bf16.msra.mxu0 %v1295
        %1361 = vmatprep.subr.bf16.mxu0 %v1298
        %1362 = vmatpush1.bf16.msra.mxu0 %v1297
        %1363 = vmatprep.subr.bf16.mxu0 %v1300
        %1364 = vmatpush1.bf16.msra.mxu0 %v1299
        %1365 = vmatprep.subr.bf16.mxu0 %v1302
        %1366 = vmatpush1.bf16.msra.mxu0 %v1301
        %1367 = vmatprep.subr.bf16.mxu0 %v1304
        %1368 = vmatpush1.bf16.msra.mxu0 %v1303
        %1369 = vmatprep.subr.bf16.mxu0 %v1306
        %1370 = vmatpush1.bf16.msra.mxu0 %v1305
        %1371 = vmatprep.subr.bf16.mxu0 %v1308
        %1372 = vmatpush1.bf16.msra.mxu0 %v1307
        %1373 = vmatprep.subr.bf16.mxu0 %v1310
        %1374 = vmatpush1.bf16.msra.mxu0 %v1309
        %1375 = vmatprep.subr.bf16.mxu0 %v1312
        %1376 = vmatpush1.bf16.msra.mxu0 %v1311
        %1377 = vmatprep.mubr.bf16.mxu0 %v1140
        %1378 = vmatmul.mubr.bf16.gmra.mrb[0].mxu0 %v1139
        %v1379 = vpop.f32.mrb[0].mxu0
        %v1380 = vadd.f32 %v1178, %v1379
        %v1381 = vpop.f32.mrb[0].mxu0
        %v1382 = vadd.f32 %v1182, %v1381
        %v1383 = vpop.f32.mrb[0].mxu0
        %v1384 = vadd.f32 %v1178, %v1383
        %v1385 = vpop.f32.mrb[0].mxu0
        %v1386 = vadd.f32 %v1182, %v1385
        %1387 = vdwg.mxu0
        %v1388 = vmul.f32 %v1380, 0.2
        %v1389 = vmul.f32 %v1382, 0.2
        %v1390 = vmul.f32 %v1384, 0.2
        %v1391 = vmul.f32 %v1386, 0.2
        %v1392 = vmax.f32 %v1380, %v1388
        %v1393 = vmax.f32 %v1382, %v1389
        %v1394 = vmax.f32 %v1384, %v1390
        %v1395 = vmax.f32 %v1386, %v1391
        %v1396 = vld [vmem:[%s5] sm:$0x3]
        %v1398 = vlaneseq
        %v1399 = vshrl.u32 %v1398, 7
        %v1400 = vsub.s32 0, %v1399
        %v1401 = vrot.slane %v1396, %v1400
        %v1402 = vlaneseq
        %v1403 = vshrl.u32 %v1402, 7
        %v1404 = vsub.s32 1, %v1403
        %v1405 = vrot.slane %v1396, %v1404
        %v1408 = vmul.f32 %v1392, %v1401
        %v1409 = vmul.f32 %v1393, %v1405
        %v1410 = vmul.f32 %v1394, %v1401
        %v1411 = vmul.f32 %v1395, %v1405
        %v1412 = vadd.f32 %v1408, %v1409
        %1413 = vadd.xlane.f32.xlu0 %v1412
        %v1414 = vpop.xlane.xlu0 %1413
        %v1415 = vadd.f32 %v1410, %v1411
        %1416 = vadd.xlane.f32.xlu0 %v1415
        %v1417 = vpop.xlane.xlu0 %1416
        %v1418 = vld [vmem:[#allocation2] sm:$0x1]
        %v1420 = vlaneseq
        %v1421 = vshrl.u32 %v1420, 7
        %v1422 = vsub.s32 0, %v1421
        %v1423 = vrot.slane %v1418, %v1422
        %v1425 = vadd.f32 %v1414, %v1423
        %v1426 = vadd.f32 %v1417, %v1423
        %v1427 = vxor.u32 %v1425, 2147483648
        %v1428 = vxor.u32 %v1426, 2147483648
        %v1429 = vmul.f32 %v1427, 1.442695
        %v1430 = vpow.pop %v1429
        %v1431 = vmul.f32 %v1428, 1.442695
        %v1432 = vpow.pop %v1431
        %v1433 = vadd.f32 %v1430, 1.0
        %v1434 = vadd.f32 %v1432, 1.0
        %v1435 = vrcp.pop %v1433
        %v1436 = vmul.f32 1.0, %v1435
        %v1437 = vrcp.pop %v1434
        %v1438 = vmul.f32 1.0, %v1437
        %vm1439 = vcmask 7168
        %1440 = vst.msk [vmem:[%s331] sm:$0xff] %vm1439, %v1436
        %1441 = vst.msk [vmem:[%s331 + $0x8] sm:$0xff] %vm1439, %v1438
        %s1442 = smul.u32 2, %s24
        %p1443 = scmp.lt.s32.totalorder %s1442, 3
        %s1444 = scalar_select %p1443, %s1442, 3
        %s1445 = smul.addr %s1444, 8
        %s1446 = scalar_lea.vmem %s7, %s1445
        // Predicated region
        $region61: #{tpu_custom_call.1} parent=47 // pred_check
          %p1447 = pneg %p194
        $region62: #{tpu_custom_call.1} parent=47 // pred_check_branch
          %1449 = sbr.rel (%p1447) target = $region64
        $region63: #{tpu_custom_call.1} parent=47 // pred_region
          %s1450 = smul.u32 2, %s24
        $region64: #{tpu_custom_call.1} parent=47 // pred_fallthru
          _
      $region48: #{tpu_custom_call.1} parent=5 // pred_fallthru
        _
      %p1451 = scmp.le.s32.totalorder 2, %s19
      // Predicated region
      $region65: #{tpu_custom_call.1} parent=5 // pred_check
        %p1452 = pneg %p1451
      $region66: #{tpu_custom_call.1} parent=5 // pred_check_branch
        %1454 = sbr.rel (%p1452) target = $region68
      $region67: #{tpu_custom_call.1} parent=5 // pred_region
        %s1455 = ssub.s32 %s19, 2
        // Predicated region
        $region69: #{tpu_custom_call.1} parent=67 // pred_check
          %p1456 = pneg %p200
        $region70: #{tpu_custom_call.1} parent=67 // pred_check_branch
          %1458 = sbr.rel (%p1456) target = $region72
        $region71: #{tpu_custom_call.1} parent=67 // pred_region
          %s1459 = smul.u32 2, %s25
          %p1460 = scmp.lt.s32.totalorder %s1459, 3
          %s1461 = scalar_select %p1460, %s1459, 3
          %s1462 = smul.addr %s1461, 8
          %s1463 = scalar_lea.vmem %s7, %s1462
        $region72: #{tpu_custom_call.1} parent=67 // pred_fallthru
          _
      $region68: #{tpu_custom_call.1} parent=5 // pred_fallthru
        _
    $region6: #{tpu_custom_call.1} parent=1 // loop_footer
      %s23 = sadd.s32 1, %s19
    $region7: #{tpu_custom_call.1} parent=1 // loop_footer_branch
      %18 = sbr.rel target = $region3
    $region8: #{tpu_custom_call.1} parent=1 // loop_exit
      _
    %1464 = vsyncpa [#allocation4], 1
    %s1465 = scalar_lea.sflag [#allocation4], 1
    %1466 = vsyncpa %s1465, 1
    %1467 = vsyncpa [#allocation6], 1

</llo_original>
